<compile_context>
chip_gen: v5e
topology: v5e:2x2
jax: 0.10.0
libtpu: 0.0.40
codegen_flags: <defaults>
</compile_context>

<pallas_src>
import jax
import jax.numpy as jnp
from jax import lax
from jax.experimental import pallas as pl
from jax.experimental.pallas import tpu as pltpu


IN_FEATURES = 32
HIDDEN = 128
N_ACTIONS = 4

_VMEM = pltpu.MemorySpace.VMEM


def policy_kernel(x_ref, w1_ref, b1_ref, w2t_ref, b2_ref, o_ref):
    # Truncation to the first 32 features happens here (zero-cost static
    # slice of the VMEM ref); when the block is already (B, 32) it is a no-op.
    x = x_ref[:, :IN_FEATURES]                                   # (B, 32)

    # fc1 + ReLU: MXU matmul with f32 accumulation.
    h = jnp.dot(x, w1_ref[...], preferred_element_type=jnp.float32)
    h = jnp.maximum(h + b1_ref[...], 0.0)                        # (B, 128)

    # fc2 on the VPU/XLU: for each of the 4 actions, multiply the lane-dense
    # (1, 128) weight row against h and lane-reduce.  This avoids pushing a
    # (128, 4) operand through the MXU (4 useful columns, heavy lane padding,
    # full push + result-FIFO latency for a tiny matmul).
    lane = lax.broadcasted_iota(jnp.int32, (1, N_ACTIONS), 1)
    acts = None
    for a in range(N_ACTIONS):                                   # static unroll (4)
        w_row = w2t_ref[a : a + 1, :]                            # (1, 128)
        contrib = jnp.sum(h * w_row, axis=-1, keepdims=True)     # (B, 1)
        sel = jnp.where(lane == a, contrib, 0.0)                 # (B, 4)
        acts = sel if acts is None else acts + sel
    logits = acts + b2_ref[...]                                  # (B, 4)

    # Numerically stable softmax.  Exact reciprocal (approx=False) keeps the
    # 1e-5 parity with the f32 reference; approx=True is marginally cheaper
    # but its relative error can exceed that tolerance.
    m = jnp.max(logits, axis=-1, keepdims=True)
    e = jnp.exp(logits - m)
    denom = jnp.sum(e, axis=-1, keepdims=True)
    o_ref[...] = e * pl.reciprocal(denom, approx=False)


def policy_network_forward(x, w1, b1, w2t, b2):
    """Reproduces PolicyNetwork.forward for a single observation.

    If x has more than 32 elements it is flattened (free, no-copy reshape) and
    the kernel consumes only the first 32 (PyTorch `numel() > 32` branch).
    If it has exactly 32 elements it is used as-is.  Fewer than 32 is
    unsupported (matches nn.Linear(32, ...) failing in PyTorch).
    """
    x = x.astype(jnp.float32)
    if x.size > IN_FEATURES:
        x2d = x.reshape(1, -1)
    elif x.size == IN_FEATURES:
        x2d = x.reshape(1, IN_FEATURES)
    else:
        raise ValueError("PolicyNetwork requires at least 32 input elements")
    n_flat = x2d.shape[1]

    return pl.pallas_call(
        policy_kernel,
        out_shape=jax.ShapeDtypeStruct((1, N_ACTIONS), jnp.float32),
        in_specs=[
            pl.BlockSpec((1, n_flat), lambda: (0, 0), memory_space=_VMEM),
            pl.BlockSpec((IN_FEATURES, HIDDEN), lambda: (0, 0), memory_space=_VMEM),
            pl.BlockSpec((1, HIDDEN), lambda: (0, 0), memory_space=_VMEM),
            pl.BlockSpec((N_ACTIONS, HIDDEN), lambda: (0, 0), memory_space=_VMEM),
            pl.BlockSpec((1, N_ACTIONS), lambda: (0, 0), memory_space=_VMEM),
        ],
        out_specs=pl.BlockSpec((1, N_ACTIONS), lambda: (0, 0), memory_space=_VMEM),
    )(x2d, w1, b1, w2t, b2)


def policy_network_forward_batched(xs, w1, b1, w2t, b2, *, tile_b=8):
    """Batched rollout variant: xs is (B, 32); grid over batch tiles.

    Amortizes the per-pallas_call dispatch overhead and raises MXU row
    utilization; the batch axis is marked "parallel" so multi-TC chips (v7x
    megacore) can shard it.  Kept in f32 (safe on v5e, still trivially cheap
    on v6e/v7x at these sizes).
    """
    xs = xs.astype(jnp.float32)
    B, F = xs.shape
    assert F == IN_FEATURES, "batched path expects pre-shaped (B, 32) observations"
    assert tile_b % 8 == 0 and B % tile_b == 0, "B must be a multiple of tile_b (multiple of 8)"

    return pl.pallas_call(
        policy_kernel,
        out_shape=jax.ShapeDtypeStruct((B, N_ACTIONS), jnp.float32),
        grid=(B // tile_b,),
        in_specs=[
            pl.BlockSpec((tile_b, IN_FEATURES), lambda i: (i, 0), memory_space=_VMEM),
            pl.BlockSpec((IN_FEATURES, HIDDEN), lambda i: (0, 0), memory_space=_VMEM),
            pl.BlockSpec((1, HIDDEN), lambda i: (0, 0), memory_space=_VMEM),
            pl.BlockSpec((N_ACTIONS, HIDDEN), lambda i: (0, 0), memory_space=_VMEM),
            pl.BlockSpec((1, N_ACTIONS), lambda i: (0, 0), memory_space=_VMEM),
        ],
        out_specs=pl.BlockSpec((tile_b, N_ACTIONS), lambda i: (i, 0), memory_space=_VMEM),
        compiler_params=pltpu.CompilerParams(dimension_semantics=("parallel",)),
    )(xs, w1, b1, w2t, b2)


def init_params(key):
    """Deterministic synthetic parameters with nn.Linear-style uniform ranges."""
    k1, k2, k3, k4 = jax.random.split(key, 4)
    bound1 = 1.0 / jnp.sqrt(IN_FEATURES)
    bound2 = 1.0 / jnp.sqrt(HIDDEN)
    # W1 stored as (in, out); W2 kept in PyTorch-native (out, in) = (4, 128).
    w1 = jax.random.uniform(k1, (IN_FEATURES, HIDDEN), jnp.float32, -bound1, bound1)
    b1 = jax.random.uniform(k2, (1, HIDDEN), jnp.float32, -bound1, bound1)
    w2t = jax.random.uniform(k3, (N_ACTIONS, HIDDEN), jnp.float32, -bound2, bound2)
    b2 = jax.random.uniform(k4, (1, N_ACTIONS), jnp.float32, -bound2, bound2)
    return w1, b1, w2t, b2


def _reference(x2d, w1, b1, w2t, b2):
    h = jnp.maximum(x2d @ w1 + b1, 0.0)
    logits = h @ w2t.T + b2
    return jax.nn.softmax(logits, axis=-1)


if __name__ == "__main__":
    key = jax.random.PRNGKey(0)
    pkey, xkey, bkey = jax.random.split(key, 3)
    w1, b1, w2t, b2 = init_params(pkey)

    # --- single observation, exercising the flatten-and-truncate branch ---
    x = jax.random.normal(xkey, (2, 4, 16, 16), jnp.float32)
    out = jax.block_until_ready(policy_network_forward(x, w1, b1, w2t, b2))
    assert out.shape == (1, N_ACTIONS)
    assert jnp.allclose(jnp.sum(out, axis=-1), 1.0, atol=1e-5)
    xr = x.reshape(-1)[:IN_FEATURES][None, :]
    ref = _reference(xr, w1, b1, w2t, b2)
    assert jnp.allclose(out, ref, atol=1e-5)

    # --- batched rollout path (same kernel body, grid over batch tiles) ---
    xs = jax.random.normal(bkey, (16, IN_FEATURES), jnp.float32)
    outs = jax.block_until_ready(
        policy_network_forward_batched(xs, w1, b1, w2t, b2, tile_b=8)
    )
    assert outs.shape == (16, N_ACTIONS)
    refb = _reference(xs, w1, b1, w2t, b2)
    assert jnp.allclose(outs, refb, atol=1e-5)

    print("KERNEL_OK")
</pallas_src>

<mosaic_0001>
module attributes {stable_mosaic.version = 11 : i64} {
  func.func @policy_kernel(%arg0: memref<1x2048xf32, #tpu.memory_space<vmem>>, %arg1: memref<32x128xf32, #tpu.memory_space<vmem>>, %arg2: memref<1x128xf32, #tpu.memory_space<vmem>>, %arg3: memref<4x128xf32, #tpu.memory_space<vmem>>, %arg4: memref<1x4xf32, #tpu.memory_space<vmem>>, %arg5: memref<1x4xf32, #tpu.memory_space<vmem>>) attributes {dimension_semantics = [], scalar_prefetch = 0 : i64, scratch_operands = 0 : i64, tpu.core_type = #tpu.core_type<tc>} {
    %c0 = arith.constant 0 : index
    %c0_0 = arith.constant 0 : index
    %0 = vector.load %arg0[%c0, %c0_0] : memref<1x2048xf32, #tpu.memory_space<vmem>>, vector<1x32xf32>
    %c0_1 = arith.constant 0 : index
    %c0_2 = arith.constant 0 : index
    %1 = vector.load %arg1[%c0_1, %c0_2] : memref<32x128xf32, #tpu.memory_space<vmem>>, vector<32x128xf32>
    %cst = arith.constant dense<0.000000e+00> : vector<1x128xf32>
    %2 = tpu.matmul %0, %1, %cst {dimension_numbers = #tpu.dot_dimension_numbers<[1], [0], [0], [1], [0, 0, 1, 1], [], []>} : vector<1x32xf32>, vector<32x128xf32>, vector<1x128xf32> -> vector<1x128xf32>
    %c0_3 = arith.constant 0 : index
    %c0_4 = arith.constant 0 : index
    %3 = vector.load %arg2[%c0_3, %c0_4] : memref<1x128xf32, #tpu.memory_space<vmem>>, vector<1x128xf32>
    %4 = arith.addf %2, %3 : vector<1x128xf32>
    %cst_5 = arith.constant 0.000000e+00 : f32
    %5 = vector.broadcast %cst_5 : f32 to vector<1x128xf32>
    %6 = arith.maximumf %4, %5 : vector<1x128xf32>
    %7 = tpu.iota {dimensions = array<i32: 1>} : vector<1x4xi32>
    %c0_6 = arith.constant 0 : index
    %c0_7 = arith.constant 0 : index
    %8 = vector.load %arg3[%c0_6, %c0_7] : memref<4x128xf32, #tpu.memory_space<vmem>>, vector<1x128xf32>
    %9 = arith.mulf %6, %8 : vector<1x128xf32>
    %cst_8 = arith.constant dense<0.000000e+00> : vector<1xf32>
    %10 = vector.multi_reduction <add>, %9, %cst_8 [1] : vector<1x128xf32> to vector<1xf32>
    %11 = vector.shape_cast %10 : vector<1xf32> to vector<1x1xf32>
    %c0_i32 = arith.constant 0 : i32
    %12 = vector.broadcast %c0_i32 : i32 to vector<1x4xi32>
    %13 = arith.cmpi eq, %7, %12 : vector<1x4xi32>
    %cst_9 = arith.constant 0.000000e+00 : f32
    %14 = vector.shape_cast %11 : vector<1x1xf32> to vector<1x1xf32>
    %15 = vector.broadcast %14 : vector<1x1xf32> to vector<1x4xf32>
    %16 = vector.broadcast %cst_9 : f32 to vector<1x4xf32>
    %17 = arith.select %13, %15, %16 : vector<1x4xi1>, vector<1x4xf32>
    %c1 = arith.constant 1 : index
    %c0_10 = arith.constant 0 : index
    %18 = vector.load %arg3[%c1, %c0_10] : memref<4x128xf32, #tpu.memory_space<vmem>>, vector<1x128xf32>
    %19 = arith.mulf %6, %18 : vector<1x128xf32>
    %cst_11 = arith.constant dense<0.000000e+00> : vector<1xf32>
    %20 = vector.multi_reduction <add>, %19, %cst_11 [1] : vector<1x128xf32> to vector<1xf32>
    %21 = vector.shape_cast %20 : vector<1xf32> to vector<1x1xf32>
    %c1_i32 = arith.constant 1 : i32
    %22 = vector.broadcast %c1_i32 : i32 to vector<1x4xi32>
    %23 = arith.cmpi eq, %7, %22 : vector<1x4xi32>
    %cst_12 = arith.constant 0.000000e+00 : f32
    %24 = vector.shape_cast %21 : vector<1x1xf32> to vector<1x1xf32>
    %25 = vector.broadcast %24 : vector<1x1xf32> to vector<1x4xf32>
    %26 = vector.broadcast %cst_12 : f32 to vector<1x4xf32>
    %27 = arith.select %23, %25, %26 : vector<1x4xi1>, vector<1x4xf32>
    %28 = arith.addf %17, %27 : vector<1x4xf32>
    %c2 = arith.constant 2 : index
    %c0_13 = arith.constant 0 : index
    %29 = vector.load %arg3[%c2, %c0_13] : memref<4x128xf32, #tpu.memory_space<vmem>>, vector<1x128xf32>
    %30 = arith.mulf %6, %29 : vector<1x128xf32>
    %cst_14 = arith.constant dense<0.000000e+00> : vector<1xf32>
    %31 = vector.multi_reduction <add>, %30, %cst_14 [1] : vector<1x128xf32> to vector<1xf32>
    %32 = vector.shape_cast %31 : vector<1xf32> to vector<1x1xf32>
    %c2_i32 = arith.constant 2 : i32
    %33 = vector.broadcast %c2_i32 : i32 to vector<1x4xi32>
    %34 = arith.cmpi eq, %7, %33 : vector<1x4xi32>
    %cst_15 = arith.constant 0.000000e+00 : f32
    %35 = vector.shape_cast %32 : vector<1x1xf32> to vector<1x1xf32>
    %36 = vector.broadcast %35 : vector<1x1xf32> to vector<1x4xf32>
    %37 = vector.broadcast %cst_15 : f32 to vector<1x4xf32>
    %38 = arith.select %34, %36, %37 : vector<1x4xi1>, vector<1x4xf32>
    %39 = arith.addf %28, %38 : vector<1x4xf32>
    %c3 = arith.constant 3 : index
    %c0_16 = arith.constant 0 : index
    %40 = vector.load %arg3[%c3, %c0_16] : memref<4x128xf32, #tpu.memory_space<vmem>>, vector<1x128xf32>
    %41 = arith.mulf %6, %40 : vector<1x128xf32>
    %cst_17 = arith.constant dense<0.000000e+00> : vector<1xf32>
    %42 = vector.multi_reduction <add>, %41, %cst_17 [1] : vector<1x128xf32> to vector<1xf32>
    %43 = vector.shape_cast %42 : vector<1xf32> to vector<1x1xf32>
    %c3_i32 = arith.constant 3 : i32
    %44 = vector.broadcast %c3_i32 : i32 to vector<1x4xi32>
    %45 = arith.cmpi eq, %7, %44 : vector<1x4xi32>
    %cst_18 = arith.constant 0.000000e+00 : f32
    %46 = vector.shape_cast %43 : vector<1x1xf32> to vector<1x1xf32>
    %47 = vector.broadcast %46 : vector<1x1xf32> to vector<1x4xf32>
    %48 = vector.broadcast %cst_18 : f32 to vector<1x4xf32>
    %49 = arith.select %45, %47, %48 : vector<1x4xi1>, vector<1x4xf32>
    %50 = arith.addf %39, %49 : vector<1x4xf32>
    %c0_19 = arith.constant 0 : index
    %c0_20 = arith.constant 0 : index
    %51 = vector.load %arg4[%c0_19, %c0_20] : memref<1x4xf32, #tpu.memory_space<vmem>>, vector<1x4xf32>
    %52 = arith.addf %50, %51 : vector<1x4xf32>
    %cst_21 = arith.constant dense<0xFF800000> : vector<1xf32>
    %53 = vector.multi_reduction <maximumf>, %52, %cst_21 [1] : vector<1x4xf32> to vector<1xf32>
    %54 = vector.shape_cast %53 : vector<1xf32> to vector<1x1xf32>
    %55 = vector.broadcast %54 : vector<1x1xf32> to vector<1x4xf32>
    %56 = arith.subf %52, %55 : vector<1x4xf32>
    %57 = math.exp %56 : vector<1x4xf32>
    %cst_22 = arith.constant dense<0.000000e+00> : vector<1xf32>
    %58 = vector.multi_reduction <add>, %57, %cst_22 [1] : vector<1x4xf32> to vector<1xf32>
    %59 = vector.shape_cast %58 : vector<1xf32> to vector<1x1xf32>
    %60 = tpu.reciprocal %59 : vector<1x1xf32> -> vector<1x1xf32>
    %61 = vector.broadcast %60 : vector<1x1xf32> to vector<1x4xf32>
    %62 = arith.mulf %57, %61 : vector<1x4xf32>
    %c0_23 = arith.constant 0 : index
    %c0_24 = arith.constant 0 : index
    %63 = vector.load %arg5[%c0_23, %c0_24] : memref<1x4xf32, #tpu.memory_space<vmem>>, vector<1x4xf32>
    tpu.vector_store %arg5[%c0_23, %c0_24], %62 {strides = array<i32>} : memref<1x4xf32, #tpu.memory_space<vmem>>, vector<1x4xf32>,
    return
  }
}

</mosaic_0001>

<llo_original>
// kernel: tpu_custom_call.1
$region0: #{tpu_custom_call.1}
  #allocation0 [shape = 'u32[]', space=smem, size = 0x4, offset = 0x4, fixed_abs, tag = 'smem constant byte address 0x4 - core index']
  #allocation1 [shape = 'u32[72,128]{1,0:T(1,128)}', space=vmem, size = 0x9000, scoped, tag = 'internal scratch']
  %s0 = inlined_call_operand.hbm [shape: f32[1,2048], index: 0, kind: input, shape index: {}]
  %s1 = inlined_call_operand.hbm [shape: f32[32,128], index: 1, kind: input, shape index: {}]
  %s2 = inlined_call_operand.vmem [shape: f32[1,128], index: 2, kind: input, shape index: {}]
  %s3 = inlined_call_operand.hbm [shape: f32[4,128], index: 3, kind: input, shape index: {}]
  %s4 = inlined_call_operand.vmem [shape: f32[1,4], index: 4, kind: input, shape index: {}]
  %s5 = inlined_call_operand.hbm [shape: f32[1,4], index: 5, kind: output, shape index: {}]
  %s6 = sld [smem:[#allocation0]]
  $region42: #{tpu_custom_call.1} parent=0
    _
  %s8 = ssub.s32 1, %s6
  %s9 = scalar_select 0, %s8, %s6
  $region1: #{tpu_custom_call.1} parent=0
    #allocation2 [shape = 'u8[8192]{0}', space=vmem, size = 0x2000, scoped, tag = 'input window, operand 0, single buffered']
    #allocation3 [shape = 's32[1]{0}', space=sflag, size = 0x4, scoped, tag = 'scoped memory for tpu_custom_call.1']
    #allocation4 [shape = 's32[1]{0}', space=sflag, size = 0x4, scoped, tag = 'scoped memory for tpu_custom_call.1']
    #allocation5 [shape = 'u8[16384]{0}', space=vmem, size = 0x4000, scoped, tag = 'input window, operand 1, single buffered']
    #allocation6 [shape = 's32[1]{0}', space=sflag, size = 0x4, scoped, tag = 'scoped memory for tpu_custom_call.1']
    #allocation7 [shape = 'u8[2048]{0}', space=vmem, size = 0x800, scoped, tag = 'input window, operand 3, single buffered']
    #allocation8 [shape = 'u8[512]{0}', space=vmem, size = 0x400, scoped, tag = 'output window, operand 0, single buffered']
    %10 = vsyncpa [#allocation3], 0
    %11 = vsyncpa [#allocation6], 0
    %12 = vsyncpa [#allocation4], 0
    // Predicated region
    $region2: #{tpu_custom_call.1} parent=1 // pred_check
      _
    $region3: #{tpu_custom_call.1} parent=1 // pred_check_branch
      %14 = sbr.rel (0) target = $region5
    $region4: #{tpu_custom_call.1} parent=1 // pred_region
      %16 = vsyncadd [#allocation3], 0
      %s18 = sshll.u32 %s0, 4
      %s19 = int_to_ptr.hbm [resolvable:$true] %s18
      %s20 = sshll.u32 [#allocation2], 4
      %s21 = int_to_ptr.vmem [resolvable:$true] %s20
      %23 = dma.hbm_to_vmem [thread:$0]  %s19, 256, %s21, [#allocation3]
    $region5: #{tpu_custom_call.1} parent=1 // pred_fallthru
      _
    // Predicated region
    $region6: #{tpu_custom_call.1} parent=1 // pred_check
      _
    $region7: #{tpu_custom_call.1} parent=1 // pred_check_branch
      %25 = sbr.rel (0) target = $region9
    $region8: #{tpu_custom_call.1} parent=1 // pred_region
      %27 = vsyncadd [#allocation6], 0
      %s28 = sshll.u32 %s1, 4
      %s29 = int_to_ptr.hbm [resolvable:$true] %s28
      %s30 = sshll.u32 [#allocation5], 4
      %s31 = int_to_ptr.vmem [resolvable:$true] %s30
      %36 = dma.hbm_to_vmem [thread:$0]  %s29, 512, %s31, [#allocation6], 128, 128, 8
    $region9: #{tpu_custom_call.1} parent=1 // pred_fallthru
      _
    // Predicated region
    $region10: #{tpu_custom_call.1} parent=1 // pred_check
      _
    $region11: #{tpu_custom_call.1} parent=1 // pred_check_branch
      %38 = sbr.rel (0) target = $region13
    $region12: #{tpu_custom_call.1} parent=1 // pred_region
      _
    $region13: #{tpu_custom_call.1} parent=1 // pred_fallthru
      _
    // Predicated region
    $region14: #{tpu_custom_call.1} parent=1 // pred_check
      _
    $region15: #{tpu_custom_call.1} parent=1 // pred_check_branch
      %40 = sbr.rel (0) target = $region17
    $region16: #{tpu_custom_call.1} parent=1 // pred_region
      %42 = vsyncadd [#allocation6], 0
      %s44 = sshll.u32 %s3, 4
      %s45 = int_to_ptr.hbm [resolvable:$true] %s44
      %s46 = sshll.u32 [#allocation7], 4
      %s47 = int_to_ptr.vmem [resolvable:$true] %s46
      %49 = dma.hbm_to_vmem [thread:$0]  %s45, 64, %s47, [#allocation6]
    $region17: #{tpu_custom_call.1} parent=1 // pred_fallthru
      _
    // Predicated region
    $region18: #{tpu_custom_call.1} parent=1 // pred_check
      _
    $region19: #{tpu_custom_call.1} parent=1 // pred_check_branch
      %51 = sbr.rel (0) target = $region21
    $region20: #{tpu_custom_call.1} parent=1 // pred_region
      _
    $region21: #{tpu_custom_call.1} parent=1 // pred_fallthru
      _
    // Predicated region
    $region22: #{tpu_custom_call.1} parent=1 // pred_check
      _
    $region23: #{tpu_custom_call.1} parent=1 // pred_check_branch
      %53 = sbr.rel (0) target = $region25
    $region24: #{tpu_custom_call.1} parent=1 // pred_region
      %55 = dma.done [#allocation3], 256
    $region25: #{tpu_custom_call.1} parent=1 // pred_fallthru
      _
    // Predicated region
    $region26: #{tpu_custom_call.1} parent=1 // pred_check
      _
    $region27: #{tpu_custom_call.1} parent=1 // pred_check_branch
      %57 = sbr.rel (0) target = $region29
    $region28: #{tpu_custom_call.1} parent=1 // pred_region
      %59 = dma.done [#allocation6], 512
    $region29: #{tpu_custom_call.1} parent=1 // pred_fallthru
      _
    // Predicated region
    $region30: #{tpu_custom_call.1} parent=1 // pred_check
      _
    $region31: #{tpu_custom_call.1} parent=1 // pred_check_branch
      %61 = sbr.rel (0) target = $region33
    $region32: #{tpu_custom_call.1} parent=1 // pred_region
      %63 = dma.done [#allocation6], 64
    $region33: #{tpu_custom_call.1} parent=1 // pred_fallthru
      _
    %v64 = vld [vmem:[#allocation2] sm:$0x1]
    %v65 = vld [vmem:[#allocation5] sm:$0xff]
    %v66 = vld [vmem:[#allocation5 + $0x8] sm:$0xff]
    %v67 = vld [vmem:[#allocation5 + $0x10] sm:$0xff]
    %v68 = vld [vmem:[#allocation5 + $0x18] sm:$0xff]
    %v69 = vld [vmem:[%s2] sm:$0x1]
    %vm70 = vcmask 261120
    %v72 = vsel %vm70, %v64, 0
    %74 = vmatpush.msra.mxu0 0.0
    %75 = vmatpush.msra.mxu0 0.0
    %76 = vmatpush.msra.mxu0 0.0
    %77 = vmatpush.msra.mxu0 0.0
    %78 = vmatpush.msra.mxu0 0.0
    %79 = vmatpush.msra.mxu0 0.0
    %80 = vmatpush.msra.mxu0 0.0
    %81 = vmatpush.msra.mxu0 0.0
    %82 = vmatpush.msra.mxu0 0.0
    %83 = vmatpush.msra.mxu0 0.0
    %84 = vmatpush.msra.mxu0 0.0
    %85 = vmatpush.msra.mxu0 0.0
    %86 = vmatpush.msra.mxu0 %v68
    %87 = vmatpush.msra.mxu0 %v67
    %88 = vmatpush.msra.mxu0 %v66
    %89 = vmatpush.msra.mxu0 %v65
    %90 = vmatmul.f32.gmra.mxu0 %v72
    %v91 = vpop.f32.mrf.mxu0
    %v92 = vadd.f32 %v69, %v91
    %93 = vdwg.mxu0
    %v94 = vmax.f32 %v92, 0.0
    %v95 = vlaneseq
    %v96 = vand.u32 %v95, 127
    %v97 = vld [vmem:[#allocation7] sm:$0x1]
    %v98 = vmul.f32 %v94, %v97
    %vm99 = vcmask 1040384
    %v100 = vsel %vm99, %v98, 0.0
    %101 = vadd.xlane.f32.xlu0 %v100
    %v102 = vpop.xlane.xlu0 %101
    %vm103 = vcmp.eq.s32.totalorder %v96, 0
    %v104 = vsel %vm103, %v102, 0.0
    %v105 = vld [vmem:[#allocation7 + $0x1] sm:$0x1]
    %v106 = vmul.f32 %v94, %v105
    %v107 = vsel %vm99, %v106, 0.0
    %108 = vadd.xlane.f32.xlu0 %v107
    %v109 = vpop.xlane.xlu0 %108
    %vm110 = vcmp.eq.s32.totalorder %v96, 1
    %v111 = vsel %vm110, %v109, 0.0
    %v112 = vadd.f32 %v104, %v111
    %v113 = vld [vmem:[#allocation7 + $0x2] sm:$0x1]
    %v114 = vmul.f32 %v94, %v113
    %v115 = vsel %vm99, %v114, 0.0
    %116 = vadd.xlane.f32.xlu0 %v115
    %v117 = vpop.xlane.xlu0 %116
    %vm118 = vcmp.eq.s32.totalorder %v96, 2
    %v119 = vsel %vm118, %v117, 0.0
    %v120 = vadd.f32 %v112, %v119
    %v121 = vld [vmem:[#allocation7 + $0x3] sm:$0x1]
    %v122 = vmul.f32 %v94, %v121
    %v123 = vsel %vm99, %v122, 0.0
    %124 = vadd.xlane.f32.xlu0 %v123
    %v125 = vpop.xlane.xlu0 %124
    %vm126 = vcmp.eq.s32.totalorder %v96, 3
    %v127 = vsel %vm126, %v125, 0.0
    %v128 = vadd.f32 %v120, %v127
    %v129 = vld [vmem:[%s4] sm:$0x1]
    %v130 = vadd.f32 %v128, %v129
    %vm131 = vcmask 24576
    %v132 = vsel %vm131, %v130, -inf
    %133 = vmax.xlane.f32.xlu0 %v132
    %v134 = vpop.xlane.xlu0 %133
    %v135 = vsub.f32 %v130, %v134
    %v136 = vmul.f32 %v135, 1.442695
    %v137 = vpow.pop %v136
    %v138 = vsel %vm131, %v137, 0.0
    %139 = vadd.xlane.f32.xlu0 %v138
    %v140 = vpop.xlane.xlu0 %139
    %v141 = vrcp.pop %v140
    %v142 = vmul.f32 %v140, %v141
    %v143 = vsub.f32 1.0, %v142
    %v144 = vmul.f32 %v141, %v143
    %v145 = vadd.f32 %v141, %v144
    %vm146 = vweird.f32 %v140
    %vm147 = vweird.f32 %v141
    %vm148 = vmor %vm146, %vm147
    %v149 = vsel %vm148, %v141, %v145
    %v150 = vand.u32 2147483647, %v140
    %vm151 = vcmp.eq.f32.partialorder %v150, 8.507059e+37
    %v152 = vand.u32 %v140, 2147483648
    %v153 = vor.u32 1.1754944e-38, %v152
    %v154 = vsel %vm151, %v153, %v149
    %v155 = vmul.f32 %v137, %v154
    %156 = vst.msk [vmem:[#allocation8] sm:$0x1] %vm131, %v155
    // Predicated region
    $region34: #{tpu_custom_call.1} parent=1 // pred_check
      _
    $region35: #{tpu_custom_call.1} parent=1 // pred_check_branch
      %158 = sbr.rel (0) target = $region37
    $region36: #{tpu_custom_call.1} parent=1 // pred_region
      %160 = vsyncadd [#allocation4], 0
      %s162 = sshll.u32 [#allocation8], 4
      %s163 = int_to_ptr.vmem [resolvable:$true] %s162
      %s164 = sshll.u32 %s5, 4
      %s165 = int_to_ptr.hbm [resolvable:$true] %s164
      %167 = dma.vmem_to_hbm [thread:$0]  %s163, 16, %s165, [#allocation4]
    $region37: #{tpu_custom_call.1} parent=1 // pred_fallthru
      _
    // Predicated region
    $region38: #{tpu_custom_call.1} parent=1 // pred_check
      _
    $region39: #{tpu_custom_call.1} parent=1 // pred_check_branch
      %169 = sbr.rel (0) target = $region41
    $region40: #{tpu_custom_call.1} parent=1 // pred_region
      %171 = dma.done [#allocation4], 16
    $region41: #{tpu_custom_call.1} parent=1 // pred_fallthru
      _
    %172 = vsyncpa [#allocation3], 1
    %173 = vsyncpa [#allocation6], 1
    %174 = vsyncpa [#allocation4], 1

</llo_original>
